<compile_context>
chip_gen: v7x
topology: tpu7x:2x2x1
jax: 0.10.0
libtpu: 0.0.40
codegen_flags: <defaults>
</compile_context>

<pallas_src>
import jax
import jax.numpy as jnp
from jax.experimental import pallas as pl
from jax.experimental.pallas import tpu as pltpu

EPS = 1e-5


# ----------------------------------------------------------------------------
# Small host-side helpers
# ----------------------------------------------------------------------------
def _cdiv(a: int, b: int) -> int:
    return -(-a // b)


def _round_up(a: int, b: int) -> int:
    return _cdiv(a, b) * b


def _vmem_budgets():
    """Returns (per-block byte budget, vmem_limit_bytes), generation-aware."""
    vmem_bytes = 64 * 1024 * 1024  # conservative default (v7x per-TC VMEM)
    try:
        vmem_bytes = pltpu.get_tpu_info().vmem_capacity_bytes
    except Exception:
        pass
    if vmem_bytes <= 64 * 1024 * 1024:
        # v7x: 64 MiB VMEM per TensorCore -- small blocks, modest limit.
        return 12 * 1024 * 1024, 40 * 1024 * 1024
    # v5e / v6e: 128 MiB VMEM.
    return 20 * 1024 * 1024, 64 * 1024 * 1024


def _pick_channel_tile(C: int, L: int, gran: int, block_budget: int) -> int:
    """Largest channel tile TC (a multiple of `gran`, or all of C) such that
    ~6 full-tile f32-sized buffers (double-buffered input + output blocks plus
    in-kernel elementwise temporaries) fit within `block_budget` bytes."""
    max_tc = block_budget // (6 * L * 4)
    if max_tc >= C:
        return C
    return max((max_tc // gran) * gran, gran)


def _ensure_two_grid_steps(B: int, C: int, tc: int, gran: int) -> int:
    """Split the channel axis further when the grid would have a single step,
    so the 'parallel' axes can actually shard across both v7x TensorCores."""
    if B * _cdiv(C, tc) >= 2:
        return tc
    half = _round_up(_cdiv(C, 2), gran)
    if half < C:
        return half
    return tc


# ----------------------------------------------------------------------------
# Kernels (math in f32, I/O in native dtype)
# ----------------------------------------------------------------------------
def _adain_kernel_length_lanes(x_ref, gb_ref, o_ref):
    # x_ref / o_ref: (TC, L)   -- length on lanes, channels on sublanes
    # gb_ref:        (TC, 2)   -- [:, 0] = gamma, [:, 1] = beta
    x = x_ref[...].astype(jnp.float32)
    inv_l = 1.0 / x.shape[-1]
    mean = jnp.sum(x, axis=-1, keepdims=True) * inv_l            # (TC, 1)
    mean_sq = jnp.sum(x * x, axis=-1, keepdims=True) * inv_l     # (TC, 1)
    var = jnp.maximum(mean_sq - mean * mean, 0.0)
    inv_std = jax.lax.rsqrt(var + EPS)
    gb = gb_ref[...].astype(jnp.float32)
    a = gb[:, 0:1] * inv_std                                     # gamma / std
    b = gb[:, 1:2] - mean * a                                    # beta - mean*a
    o_ref[...] = (x * a + b).astype(o_ref.dtype)


def _adain_kernel_channel_lanes(x_ref, gb_ref, o_ref):
    # x_ref / o_ref: (L, TC)   -- channels on lanes, length on sublanes
    # gb_ref:        (2, TC)   -- row 0 = gamma, row 1 = beta
    x = x_ref[...].astype(jnp.float32)
    inv_l = 1.0 / x.shape[0]
    mean = jnp.sum(x, axis=0, keepdims=True) * inv_l             # (1, TC)
    mean_sq = jnp.sum(x * x, axis=0, keepdims=True) * inv_l      # (1, TC)
    var = jnp.maximum(mean_sq - mean * mean, 0.0)
    inv_std = jax.lax.rsqrt(var + EPS)
    gb = gb_ref[...].astype(jnp.float32)
    a = gb[0:1, :] * inv_std
    b = gb[1:2, :] - mean * a
    o_ref[...] = (x * a + b).astype(o_ref.dtype)


# ----------------------------------------------------------------------------
# Wrapper
# ----------------------------------------------------------------------------
def adaptive_instance_norm(x, style, weight, bias, lr_mul=1.0):
    """x: (B, C, L), style: (B, S), weight: (2C, S), bias: (2C,).

    Returns (B, C, L) in x.dtype."""
    B, C, L = x.shape
    S = style.shape[1]
    out_dtype = x.dtype

    # --- EqualLinear, hoisted to a single XLA matmul in the wrapper (f32) ---
    scale = (1.0 / jnp.sqrt(jnp.float32(S))) * lr_mul
    st = (style.astype(jnp.float32) @ (weight.astype(jnp.float32) * scale).T
          + bias.astype(jnp.float32) * lr_mul)                   # (B, 2C)

    block_budget, vmem_limit = _vmem_budgets()
    itemsize = jnp.dtype(out_dtype).itemsize
    compiler_params = pltpu.CompilerParams(
        dimension_semantics=("parallel", "parallel"),
        vmem_limit_bytes=vmem_limit,
    )

    # Lane-dense layout choice: when L is not a multiple of the 128-wide lane
    # but C is (StyleSwin early stages), put channels on the lane axis so
    # every store is a full, unmasked vst.
    channels_on_lanes = (L % 128 != 0) and (C % 128 == 0)

    if channels_on_lanes:
        gran = 128                                   # lane granularity
        tc = _pick_channel_tile(C, L, gran, block_budget)
        tc = _ensure_two_grid_steps(B, C, tc, gran)
        grid = (B, _cdiv(C, tc))
        gb = st.reshape(B, 2, C)                     # row 0 gamma, row 1 beta
        x_in = jnp.transpose(x, (0, 2, 1))           # (B, L, C) layout plumbing
        x_spec = pl.BlockSpec((pl.Squeezed(), L, tc), lambda b, c: (b, 0, c))
        gb_spec = pl.BlockSpec((pl.Squeezed(), 2, tc), lambda b, c: (b, 0, c))
        out = pl.pallas_call(
            _adain_kernel_channel_lanes,
            out_shape=jax.ShapeDtypeStruct((B, L, C), out_dtype),
            grid_spec=pltpu.PrefetchScalarGridSpec(
                num_scalar_prefetch=0,
                grid=grid,
                in_specs=[x_spec, gb_spec],
                out_specs=x_spec,
            ),
            compiler_params=compiler_params,
        )(x_in, gb)
        return jnp.transpose(out, (0, 2, 1))         # back to (B, C, L)

    # Standard layout: channels on sublanes, length on lanes.
    gran = max(8, 8 * (4 // max(1, itemsize)))       # 8 (f32) / 16 (bf16) / 32 (i8)
    tc = _pick_channel_tile(C, L, gran, block_budget)
    tc = _ensure_two_grid_steps(B, C, tc, gran)
    grid = (B, _cdiv(C, tc))
    gb = jnp.stack([st[:, :C], st[:, C:]], axis=-1)  # (B, C, 2): gamma, beta
    x_spec = pl.BlockSpec((pl.Squeezed(), tc, L), lambda b, c: (b, c, 0))
    gb_spec = pl.BlockSpec((pl.Squeezed(), tc, 2), lambda b, c: (b, c, 0))
    return pl.pallas_call(
        _adain_kernel_length_lanes,
        out_shape=jax.ShapeDtypeStruct((B, C, L), out_dtype),
        grid_spec=pltpu.PrefetchScalarGridSpec(
            num_scalar_prefetch=0,
            grid=grid,
            in_specs=[x_spec, gb_spec],
            out_specs=x_spec,
        ),
        compiler_params=compiler_params,
    )(x, gb)


# ----------------------------------------------------------------------------
# Pure-JAX reference (matches the PyTorch module, computed in f32)
# ----------------------------------------------------------------------------
def adaptive_instance_norm_ref(x, style, weight, bias, lr_mul=1.0):
    B, C, L = x.shape
    S = style.shape[1]
    x = x.astype(jnp.float32)
    style = style.astype(jnp.float32)
    weight = weight.astype(jnp.float32)
    bias = bias.astype(jnp.float32)
    scale = (1.0 / jnp.sqrt(jnp.float32(S))) * lr_mul
    st = style @ (weight * scale).T + bias * lr_mul           # (B, 2C)
    gamma = st[:, :C][..., None]                               # (B, C, 1)
    beta = st[:, C:][..., None]                                # (B, C, 1)
    mean = x.mean(-1, keepdims=True)
    var = ((x - mean) ** 2).mean(-1, keepdims=True)            # biased
    normed = (x - mean) / jnp.sqrt(var + EPS)
    return gamma * normed + beta


# ----------------------------------------------------------------------------
# Self-test
# ----------------------------------------------------------------------------
def _run_case(key, B, C, L, S, dtype, atol, rtol):
    kx, ks, kw, kb = jax.random.split(key, 4)
    x = jax.random.normal(kx, (B, C, L), dtype=jnp.float32).astype(dtype)
    style = jax.random.normal(ks, (B, S), dtype=jnp.float32)
    weight = jax.random.normal(kw, (2 * C, S), dtype=jnp.float32)
    bias = 0.1 * jax.random.normal(kb, (2 * C,), dtype=jnp.float32)

    out = adaptive_instance_norm(x, style, weight, bias)
    out = jax.block_until_ready(out)
    assert out.shape == (B, C, L), f"bad shape {out.shape}"
    assert out.dtype == dtype, f"bad dtype {out.dtype} (expected {dtype})"

    ref = adaptive_instance_norm_ref(x, style, weight, bias)
    assert jnp.allclose(out.astype(jnp.float32), ref, atol=atol, rtol=rtol), (
        f"mismatch vs reference for shape {(B, C, L)} dtype {dtype}")


if __name__ == "__main__":
    key = jax.random.PRNGKey(0)
    k1, k2, k3 = jax.random.split(key, 3)

    # 1) f32, tiny shape, standard length-on-lanes layout.
    _run_case(k1, B=2, C=4, L=16, S=8, dtype=jnp.float32, atol=1e-4, rtol=1e-4)

    # 2) f32, C multiple of 128 with short L: channels-on-lanes layout and the
    #    >=2-grid-steps split (B=1) are exercised.
    _run_case(k2, B=1, C=256, L=16, S=8, dtype=jnp.float32, atol=1e-4, rtol=1e-4)

    # 3) bf16 activations: native-dtype HBM I/O, f32 math inside the kernel.
    _run_case(k3, B=2, C=8, L=16, S=8, dtype=jnp.bfloat16, atol=5e-2, rtol=5e-2)

    print("KERNEL_OK")
</pallas_src>

<mosaic_0001>
module attributes {stable_mosaic.version = 11 : i64} {
  func.func @_adain_kernel_length_lanes(%arg0: i32, %arg1: i32, %arg2: memref<1x4x16xf32, #tpu.memory_space<vmem>>, %arg3: memref<1x4x2xf32, #tpu.memory_space<vmem>>, %arg4: memref<1x4x16xf32, #tpu.memory_space<vmem>>) attributes {dimension_semantics = [#tpu.dimension_semantics<parallel>, #tpu.dimension_semantics<parallel>], iteration_bounds = array<i64: 2, 1>, scalar_prefetch = 0 : i64, scratch_operands = 0 : i64, tpu.core_type = #tpu.core_type<tc>, window_params = [{transform_indices = @transform_0, window_bounds = array<i64: 1, 4, 16>}, {transform_indices = @transform_1, window_bounds = array<i64: 1, 4, 2>}, {transform_indices = @transform_2, window_bounds = array<i64: 1, 4, 16>}]} {
    %c0 = arith.constant 0 : index
    %c0_0 = arith.constant 0 : index
    %c0_1 = arith.constant 0 : index
    %0 = vector.load %arg2[%c0, %c0_0, %c0_1] : memref<1x4x16xf32, #tpu.memory_space<vmem>>, vector<1x4x16xf32>
    %1 = vector.shape_cast %0 : vector<1x4x16xf32> to vector<4x16xf32>
    %cst = arith.constant dense<0.000000e+00> : vector<4xf32>
    %2 = vector.multi_reduction <add>, %1, %cst [1] : vector<4x16xf32> to vector<4xf32>
    %3 = vector.shape_cast %2 : vector<4xf32> to vector<4x1xf32>
    %cst_2 = arith.constant 6.250000e-02 : f32
    %4 = vector.broadcast %cst_2 : f32 to vector<4x1xf32>
    %5 = arith.mulf %3, %4 : vector<4x1xf32>
    %6 = arith.mulf %1, %1 : vector<4x16xf32>
    %cst_3 = arith.constant dense<0.000000e+00> : vector<4xf32>
    %7 = vector.multi_reduction <add>, %6, %cst_3 [1] : vector<4x16xf32> to vector<4xf32>
    %8 = vector.shape_cast %7 : vector<4xf32> to vector<4x1xf32>
    %cst_4 = arith.constant 6.250000e-02 : f32
    %9 = vector.broadcast %cst_4 : f32 to vector<4x1xf32>
    %10 = arith.mulf %8, %9 : vector<4x1xf32>
    %11 = arith.mulf %5, %5 : vector<4x1xf32>
    %12 = arith.subf %10, %11 : vector<4x1xf32>
    %cst_5 = arith.constant 0.000000e+00 : f32
    %13 = vector.broadcast %cst_5 : f32 to vector<4x1xf32>
    %14 = arith.maximumf %12, %13 : vector<4x1xf32>
    %cst_6 = arith.constant 9.99999974E-6 : f32
    %15 = vector.broadcast %cst_6 : f32 to vector<4x1xf32>
    %16 = arith.addf %14, %15 : vector<4x1xf32>
    %17 = math.rsqrt %16 : vector<4x1xf32>
    %c0_7 = arith.constant 0 : index
    %c0_8 = arith.constant 0 : index
    %c0_9 = arith.constant 0 : index
    %18 = vector.load %arg3[%c0_7, %c0_8, %c0_9] : memref<1x4x2xf32, #tpu.memory_space<vmem>>, vector<1x4x2xf32>
    %19 = vector.shape_cast %18 : vector<1x4x2xf32> to vector<4x2xf32>
    %20 = vector.extract_strided_slice %19 {offsets = [0, 0], sizes = [4, 1], strides = [1, 1]} : vector<4x2xf32> to vector<4x1xf32>
    %21 = arith.mulf %20, %17 : vector<4x1xf32>
    %22 = vector.extract_strided_slice %19 {offsets = [0, 1], sizes = [4, 1], strides = [1, 1]} : vector<4x2xf32> to vector<4x1xf32>
    %23 = arith.mulf %5, %21 : vector<4x1xf32>
    %24 = arith.subf %22, %23 : vector<4x1xf32>
    %25 = vector.broadcast %21 : vector<4x1xf32> to vector<4x16xf32>
    %26 = arith.mulf %1, %25 : vector<4x16xf32>
    %27 = vector.broadcast %24 : vector<4x1xf32> to vector<4x16xf32>
    %28 = arith.addf %26, %27 : vector<4x16xf32>
    %c0_10 = arith.constant 0 : index
    %c0_11 = arith.constant 0 : index
    %c0_12 = arith.constant 0 : index
    %29 = vector.load %arg4[%c0_10, %c0_11, %c0_12] : memref<1x4x16xf32, #tpu.memory_space<vmem>>, vector<1x4x16xf32>
    %30 = vector.shape_cast %29 : vector<1x4x16xf32> to vector<4x16xf32>
    %31 = vector.shape_cast %28 : vector<4x16xf32> to vector<1x4x16xf32>
    tpu.vector_store %arg4[%c0_10, %c0_11, %c0_12], %31 {strides = array<i32>} : memref<1x4x16xf32, #tpu.memory_space<vmem>>, vector<1x4x16xf32>,
    return
  }
  func.func @transform_0(%arg0: i32, %arg1: i32) -> (i32, i32, i32) {
    %c0_i32 = arith.constant 0 : i32
    %c0_i32_0 = arith.constant 0 : i32
    return %arg0, %arg1, %c0_i32 : i32, i32, i32
  }
  func.func @transform_1(%arg0: i32, %arg1: i32) -> (i32, i32, i32) {
    %c0_i32 = arith.constant 0 : i32
    %c0_i32_0 = arith.constant 0 : i32
    return %arg0, %arg1, %c0_i32 : i32, i32, i32
  }
  func.func @transform_2(%arg0: i32, %arg1: i32) -> (i32, i32, i32) {
    %c0_i32 = arith.constant 0 : i32
    %c0_i32_0 = arith.constant 0 : i32
    return %arg0, %arg1, %c0_i32 : i32, i32, i32
  }
}

</mosaic_0001>

<llo_original>
// kernel: tpu_custom_call.1
$region0: #{tpu_custom_call.1}
  #allocation0 [shape = 'u32[]', space=smem, size = 0x4, offset = 0x4, fixed_abs, tag = 'smem constant byte address 0x4 - core index']
  #allocation1 [shape = 'u32[144,128]{1,0:T(1,128)}', space=vmem, size = 0x12000, scoped, tag = 'internal scratch']
  %s0 = inlined_call_operand.vmem [shape: f32[2,4,16], index: 0, kind: input, shape index: {}]
  %s1 = inlined_call_operand.vmem [shape: f32[2,4,2], index: 1, kind: input, shape index: {}]
  %s2 = inlined_call_operand.hbm [shape: f32[2,4,16], index: 2, kind: output, shape index: {}]
  %s3 = sld [smem:[#allocation0]]
  $region41: #{tpu_custom_call.1} parent=0
    _
  %s5 = ssub.s32 1, %s3
  %s6 = scalar_select 0, %s5, %s3
  $region1: #{tpu_custom_call.1} parent=0
    #allocation2 [shape = 'u8[4096]{0}', space=vmem, size = 0x1000, scoped, tag = 'output window, operand 0']
    #allocation3 [shape = 's32[2]{0}', space=sflag, size = 0x8, scoped, tag = 'scoped memory for tpu_custom_call.1']
    %7 = vsyncpa [#allocation3], 0
    %s8 = scalar_lea.sflag [#allocation3], 1
    %9 = vsyncpa %s8, 0
    loop: start=0, step=1, limit=4
    $region2: #{tpu_custom_call.1} parent=1 // loop_pre_header
      _
    $region3: #{tpu_custom_call.1} parent=1 // loop_header
      %s11 = sphi 0, %s15
      %p12 = scmp.ge.s32.totalorder %s11, 4
      %s18 = sphi 0, %s30
      %s19 = sphi 0, %s26
      %s20 = sphi 0, %s18
      %s21 = sphi 0, %s19
      %s22 = sphi 0, %s20
      %s23 = sphi 0, %s21
      %s35 = sphi 0, %s37
      %s38 = sphi 0, %s35
      %s39 = sphi 0, %s38
      %s55 = sphi 0, %s39
      %s63 = sphi 0, %s65
      %s66 = sphi 0, %s63
      %s67 = sphi 0, %s66
      %s83 = sphi 0, %s67
      %s91 = sphi 0, %s93
      %s94 = sphi 0, %s91
      %s95 = sphi 0, %s94
      %s111 = sphi 0, %s95
    $region4: #{tpu_custom_call.1} parent=1 // loop_header_branch
      %14 = sbr.rel (%p12) target = $region8
    $region5: #{tpu_custom_call.1} parent=1 // loop_body
      %s16 = ssub.s32 %s11, 1
      %s17 = ssub.s32 %s11, 2
      %s24 = sadd.s32 1, %s19
      %p25 = scmp.ge.s32.totalorder %s24, 1
      %s26 = scalar_select %p25, 0, %s24
      %s27 = sadd.s32 1, %s18
      %s28 = scalar_select %p25, %s27, %s18
      %p29 = scmp.ge.s32.totalorder %s28, 2
      %s30 = scalar_select %p29, 0, %s28
      %s31 = ssub.s32 %s18, %s30
      %s32 = ssub.s32 %s19, %s26
      %s33 = sor.u32 %s31, %s32
      %p34 = scmp.eq.s32.totalorder %s33, 0
      %s36 = sadd.s32 %s35, 1
      %s37 = scalar_select %p34, %s35, %s36
      %p40 = pneg %p34
      %p41 = scmp.eq.s32.totalorder %s11, 1
      %p42 = por %p40, %p41
      %p43 = scmp.ne.s32.totalorder %s35, %s38
      %p44 = scmp.eq.s32.totalorder %s11, 0
      %p45 = por %p43, %p44
      %p46 = scmp.ne.s32.totalorder %s35, %s38
      %p47 = scmp.eq.s32.totalorder %s16, 1
      %p48 = por %p46, %p47
      %p49 = scmp.ne.s32.totalorder %s38, %s39
      %p50 = scmp.eq.s32.totalorder %s16, 0
      %p51 = por %p49, %p50
      %p52 = scmp.ne.s32.totalorder %s38, %s39
      %p53 = scmp.eq.s32.totalorder %s17, 1
      %p54 = por %p52, %p53
      %p56 = scmp.ne.s32.totalorder %s39, %s55
      %p57 = scmp.eq.s32.totalorder %s17, 0
      %p58 = por %p56, %p57
      %s59 = ssub.s32 %s18, %s30
      %s60 = ssub.s32 %s19, %s26
      %s61 = sor.u32 %s59, %s60
      %p62 = scmp.eq.s32.totalorder %s61, 0
      %s64 = sadd.s32 %s63, 1
      %s65 = scalar_select %p62, %s63, %s64
      %p68 = pneg %p62
      %p69 = scmp.eq.s32.totalorder %s11, 1
      %p70 = por %p68, %p69
      %p71 = scmp.ne.s32.totalorder %s63, %s66
      %p72 = scmp.eq.s32.totalorder %s11, 0
      %p73 = por %p71, %p72
      %p74 = scmp.ne.s32.totalorder %s63, %s66
      %p75 = scmp.eq.s32.totalorder %s16, 1
      %p76 = por %p74, %p75
      %p77 = scmp.ne.s32.totalorder %s66, %s67
      %p78 = scmp.eq.s32.totalorder %s16, 0
      %p79 = por %p77, %p78
      %p80 = scmp.ne.s32.totalorder %s66, %s67
      %p81 = scmp.eq.s32.totalorder %s17, 1
      %p82 = por %p80, %p81
      %p84 = scmp.ne.s32.totalorder %s67, %s83
      %p85 = scmp.eq.s32.totalorder %s17, 0
      %p86 = por %p84, %p85
      %s87 = ssub.s32 %s18, %s30
      %s88 = ssub.s32 %s19, %s26
      %s89 = sor.u32 %s87, %s88
      %p90 = scmp.eq.s32.totalorder %s89, 0
      %s92 = sadd.s32 %s91, 1
      %s93 = scalar_select %p90, %s91, %s92
      %p96 = pneg %p90
      %p97 = scmp.eq.s32.totalorder %s11, 1
      %p98 = por %p96, %p97
      %p99 = scmp.ne.s32.totalorder %s91, %s94
      %p100 = scmp.eq.s32.totalorder %s11, 0
      %p101 = por %p99, %p100
      %p102 = scmp.ne.s32.totalorder %s91, %s94
      %p103 = scmp.eq.s32.totalorder %s16, 1
      %p104 = por %p102, %p103
      %p105 = scmp.ne.s32.totalorder %s94, %s95
      %p106 = scmp.eq.s32.totalorder %s16, 0
      %p107 = por %p105, %p106
      %p108 = scmp.ne.s32.totalorder %s94, %s95
      %p109 = scmp.eq.s32.totalorder %s17, 1
      %p110 = por %p108, %p109
      %p112 = scmp.ne.s32.totalorder %s95, %s111
      %p113 = scmp.eq.s32.totalorder %s17, 0
      %p114 = por %p112, %p113
      %p115 = scmp.le.s32.totalorder 1, %s11
      %p116 = scmp.lt.s32.totalorder %s11, 3
      %p117 = pnand %p115, %p116
      %p118 = pneg %p117
      // Predicated region
      $region9: #{tpu_custom_call.1} parent=5 // pred_check
        _
      $region10: #{tpu_custom_call.1} parent=5 // pred_check_branch
        %120 = sbr.rel (%p117) target = $region12
      $region11: #{tpu_custom_call.1} parent=5 // pred_region
        %s121 = ssub.s32 %s11, 1
      $region12: #{tpu_custom_call.1} parent=5 // pred_fallthru
        _
      %p122 = scmp.lt.s32.totalorder %s11, 2
      // Predicated region
      $region13: #{tpu_custom_call.1} parent=5 // pred_check
        %p123 = pneg %p122
      $region14: #{tpu_custom_call.1} parent=5 // pred_check_branch
        %125 = sbr.rel (%p123) target = $region16
      $region15: #{tpu_custom_call.1} parent=5 // pred_region
        // Predicated region
        $region17: #{tpu_custom_call.1} parent=15 // pred_check
          %p126 = pneg %p45
        $region18: #{tpu_custom_call.1} parent=15 // pred_check_branch
          %128 = sbr.rel (%p126) target = $region20
        $region19: #{tpu_custom_call.1} parent=15 // pred_region
          %p129 = scmp.lt.s32.totalorder %s18, 1
          %s130 = scalar_select %p129, %s18, 1
          %p131 = scmp.lt.s32.totalorder %s19, 0
          %s132 = scalar_select %p131, %s19, 0
          %s133 = sadd.s32 %s132, %s130
          %s134 = smul.addr %s133, 4
          %s135 = scalar_lea.vmem %s0, %s134
        $region20: #{tpu_custom_call.1} parent=15 // pred_fallthru
          _
        // Predicated region
        $region21: #{tpu_custom_call.1} parent=15 // pred_check
          %p136 = pneg %p73
        $region22: #{tpu_custom_call.1} parent=15 // pred_check_branch
          %138 = sbr.rel (%p136) target = $region24
        $region23: #{tpu_custom_call.1} parent=15 // pred_region
          %p139 = scmp.lt.s32.totalorder %s18, 1
          %s140 = scalar_select %p139, %s18, 1
          %p141 = scmp.lt.s32.totalorder %s19, 0
          %s142 = scalar_select %p141, %s19, 0
          %s143 = sadd.s32 %s142, %s140
          %s144 = smul.addr %s143, 4
          %s145 = scalar_lea.vmem %s1, %s144
        $region24: #{tpu_custom_call.1} parent=15 // pred_fallthru
          _
      $region16: #{tpu_custom_call.1} parent=5 // pred_fallthru
        _
      %p146 = scmp.le.s32.totalorder 1, %s11
      %p147 = scmp.lt.s32.totalorder %s11, 3
      %p148 = pnand %p146, %p147
      %p149 = pneg %p148
      // Predicated region
      $region25: #{tpu_custom_call.1} parent=5 // pred_check
        _
      $region26: #{tpu_custom_call.1} parent=5 // pred_check_branch
        %151 = sbr.rel (%p148) target = $region28
      $region27: #{tpu_custom_call.1} parent=5 // pred_region
        %s152 = ssub.s32 %s11, 1
        %p153 = scmp.lt.s32.totalorder %s20, 1
        %s154 = scalar_select %p153, %s20, 1
        %p155 = scmp.lt.s32.totalorder %s21, 0
        %s156 = scalar_select %p155, %s21, 0
        %s157 = sadd.s32 %s156, %s154
        %s158 = smul.addr %s157, 4
        %s159 = scalar_lea.vmem %s0, %s158
        %p160 = pneg %p51
        %p161 = pneg %p48
        %p162 = scmp.lt.s32.totalorder %s20, 1
        %s163 = scalar_select %p162, %s20, 1
        %p164 = scmp.lt.s32.totalorder %s21, 0
        %s165 = scalar_select %p164, %s21, 0
        %s166 = sadd.s32 %s165, %s163
        %s167 = smul.addr %s166, 4
        %s168 = scalar_lea.vmem %s1, %s167
        %p169 = pneg %p79
        %p170 = pneg %p76
        %p171 = pneg %p107
        %p172 = pneg %p104
        %s173 = sand.u32 %s94, 1
        %s174 = scalar_lea.sflag [#allocation3], %s173
        %s175 = sand.u32 %s94, 1
        %s176 = smul.addr %s175, 4
        %s177 = scalar_lea.vmem [#allocation2], %s176
        %p178 = scmp.lt.s32.totalorder %s20, 1
        %s179 = scalar_select %p178, %s20, 1
        %p180 = scmp.lt.s32.totalorder %s21, 0
        %s181 = scalar_select %p180, %s21, 0
        %s182 = sadd.s32 %s181, %s179
        %s183 = smul.addr %s182, 4
        %s184 = scalar_lea.vmem %s0, %s183
        %p185 = scmp.lt.s32.totalorder %s20, 1
        %s186 = scalar_select %p185, %s20, 1
        %p187 = scmp.lt.s32.totalorder %s21, 0
        %s188 = scalar_select %p187, %s21, 0
        %s189 = sadd.s32 %s188, %s186
        %s190 = smul.addr %s189, 4
        %s191 = scalar_lea.vmem %s1, %s190
        %v192 = vld [vmem:[%s184] sm:$0xf]
        %vm193 = vcmask 125952
        %v194 = vsel %vm193, %v192, 0.0
        %195 = vadd.xlane.f32.xlu0 %v194
        %v196 = vpop.xlane.xlu0 %195
        %v197 = vmul.f32 %v196, 0.0625
        %v198 = vmul.f32 %v192, %v192
        %v199 = vsel %vm193, %v198, 0.0
        %200 = vadd.xlane.f32.xlu0 %v199
        %v201 = vpop.xlane.xlu0 %200
        %v202 = vmul.f32 %v201, 0.0625
        %v203 = vmul.f32 %v197, %v197
        %v204 = vsub.f32 %v202, %v203
        %v205 = vmax.f32 %v204, 0.0
        %v206 = vadd.f32 %v205, 1e-05
        %v207 = vrsqrt.pop %v206
        %v208 = vld [vmem:[%s191] sm:$0xf]
        %v209 = vmul.f32 %v208, %v207
        %v210 = vmul.f32 %v197, %v209
        %212 = vrot.lane.b32.xlu0 %v210, 1
        %v213 = vpop.permute.xlu0 %212
        %v215 = vsub.f32 %v208, %v213
        %217 = vset.pattern.permute.xlu0 0
        %218 = vperm.xlu0 %217, %v209
        %v219 = vpop.permute.xlu0 %218
        %v221 = vmul.f32 %v192, %v219
        %223 = vset.pattern.permute.xlu0 1
        %224 = vperm.xlu0 %223, %v215
        %v225 = vpop.permute.xlu0 %224
        %v227 = vadd.f32 %v221, %v225
        %228 = vst.msk [vmem:[%s177] sm:$0xf] %vm193, %v227
        %s229 = sand.u32 %s94, 1
        %s230 = scalar_lea.sflag [#allocation3], %s229
        %s231 = sand.u32 %s94, 1
        %s232 = smul.addr %s231, 4
        %s233 = scalar_lea.vmem [#allocation2], %s232
        // Predicated region
        $region29: #{tpu_custom_call.1} parent=27 // pred_check
          %p234 = pneg %p104
        $region30: #{tpu_custom_call.1} parent=27 // pred_check_branch
          %236 = sbr.rel (%p234) target = $region32
        $region31: #{tpu_custom_call.1} parent=27 // pred_region
          %s238 = ssub.s32 64, 64
          %239 = vsyncadd %s230, %s238
          %s240 = sadd.s32 %s21, %s20
          %s241 = smul.addr %s240, 64
          %s242 = scalar_lea.hbm %s2, %s241
          %s244 = sshll.u32 %s233, 4
          %s245 = int_to_ptr.vmem [resolvable:$true] %s244
          %247 = dma.vmem_to_hbm [thread:$0]  %s245, 64, %s242, %s230
        $region32: #{tpu_custom_call.1} parent=27 // pred_fallthru
          _
      $region28: #{tpu_custom_call.1} parent=5 // pred_fallthru
        _
      %p248 = scmp.le.s32.totalorder 2, %s11
      // Predicated region
      $region33: #{tpu_custom_call.1} parent=5 // pred_check
        %p249 = pneg %p248
      $region34: #{tpu_custom_call.1} parent=5 // pred_check_branch
        %251 = sbr.rel (%p249) target = $region36
      $region35: #{tpu_custom_call.1} parent=5 // pred_region
        %s252 = ssub.s32 %s11, 2
        // Predicated region
        $region37: #{tpu_custom_call.1} parent=35 // pred_check
          %p253 = pneg %p110
        $region38: #{tpu_custom_call.1} parent=35 // pred_check_branch
          %255 = sbr.rel (%p253) target = $region40
        $region39: #{tpu_custom_call.1} parent=35 // pred_region
          %s256 = sand.u32 %s95, 1
          %s257 = scalar_lea.sflag [#allocation3], %s256
          %s258 = sand.u32 %s95, 1
          %s259 = smul.addr %s258, 4
          %s260 = scalar_lea.vmem [#allocation2], %s259
          %261 = dma.done %s257, 64
        $region40: #{tpu_custom_call.1} parent=35 // pred_fallthru
          _
      $region36: #{tpu_custom_call.1} parent=5 // pred_fallthru
        _
    $region6: #{tpu_custom_call.1} parent=1 // loop_footer
      %s15 = sadd.s32 1, %s11
    $region7: #{tpu_custom_call.1} parent=1 // loop_footer_branch
      %10 = sbr.rel target = $region3
    $region8: #{tpu_custom_call.1} parent=1 // loop_exit
      _
    %262 = vsyncpa [#allocation3], 1
    %s263 = scalar_lea.sflag [#allocation3], 1
    %264 = vsyncpa %s263, 1

</llo_original>
